<compile_context>
chip_gen: v7x
topology: tpu7x:2x2x1
jax: 0.10.0
libtpu: 0.0.40
codegen_flags: <defaults>
</compile_context>

<pallas_src>
import jax
import jax.numpy as jnp
from jax.experimental import pallas as pl
from jax.experimental.pallas import tpu as pltpu

K = 3     # kernel_size
PAD = 1   # padding (stride is 1, the module's default)


def _round_up(x, m):
    return ((x + m - 1) // m) * m


def _pick_tile_m(m):
    """Pixel-tile (lane) size TM. Prefer 512-1024 lanes AND >=4 grid steps
    (>=2 per TensorCore on v7x); never fall back to 128 lanes for large M."""
    for tm in (1024, 512):
        if -(-m // tm) >= 4:
            return tm
    for tm in (1024, 512, 256):
        if -(-m // tm) >= 2:
            return tm
    return min(_round_up(max(m, 1), 128), 256)


def _pick_tile_k(kc, tm, g, op_bytes, budget_bytes):
    """Largest multiple-of-128 divisor of kc whose double-buffered streamed
    blocks (patches + weights) fit the VMEM budget."""
    q = kc // 128
    for d in sorted((d for d in range(1, q + 1) if q % d == 0), reverse=True):
        tk = 128 * d
        if 2 * (tk * tm + g * tk) * op_bytes <= budget_bytes:
            return tk
    return 128


def _sigmoid(x):
    # One EUP op (tanh) per sigmoid instead of exp + reciprocal.
    return 0.5 * (jnp.tanh(0.5 * x) + 1.0)


def convlstm_kernel(wT_ref, pT_ref, cT_ref, ht_ref, ct_ref, acc_ref):
    """One (M-tile, Kc-tile) step of the fused ConvLSTM cell.

    wT_ref : (4*Ch, TK)  fused conv weights (x & h paths + bias row), transposed.
    pT_ref : (TK, TM)    9-tap patches + ones (bias) row; pixels on lanes.
    cT_ref : (Ch, TM)    previous cell state, channels on sublanes.
    ht_ref : (Ch, TM)    new hidden state (written on the last Kc step).
    ct_ref : (Ch, TM)    new cell state   (written on the last Kc step).
    acc_ref: (4*Ch, TM)  f32 gate accumulator (VMEM scratch).
    Gate order along the sublane axis: [i, f, c, o].
    """
    k = pl.program_id(1)

    @pl.when(k == 0)
    def _():
        acc_ref[...] = jnp.zeros_like(acc_ref)

    # One MXU matmul per step; all 9 taps x {x,h} x 4 gates (and the bias via
    # the ones row) live on the contraction axis. f32 accumulation.
    acc_ref[...] += jnp.dot(wT_ref[...], pT_ref[...],
                            preferred_element_type=jnp.float32)

    @pl.when(k == pl.num_programs(1) - 1)
    def _():
        Ch = ct_ref.shape[0]
        gates = acc_ref[...]
        # Sublane-aligned static sub-views (Ch a multiple of 8 keeps them free).
        i_g = _sigmoid(gates[0 * Ch:1 * Ch, :])
        f_g = _sigmoid(gates[1 * Ch:2 * Ch, :])
        c_t = jnp.tanh(gates[2 * Ch:3 * Ch, :])
        o_g = _sigmoid(gates[3 * Ch:4 * Ch, :])

        c_prev = cT_ref[...].astype(jnp.float32)
        c_new = c_t * i_g + c_prev * f_g
        h_new = o_g * jnp.tanh(c_new)

        ct_ref[...] = c_new.astype(ct_ref.dtype)
        ht_ref[...] = h_new.astype(ht_ref.dtype)


def conv_lstm_cell_cm(x_cm, h_cm, c_cm, wx, wh, b, *, use_bf16=True):
    """Channel-major ConvLSTM cell (preferred for multi-step rollouts).

    x_cm: (Cin, N, H, W); h_cm, c_cm: (Ch, N, H, W)   -- channel-major.
    wx: (K, K, Cin, 4*Ch) HWIO; wh: (K, K, Ch, 4*Ch) HWIO; b: (4*Ch,)
    Gate order along the fused output-channel axis: [i, f, c, o].
    Returns (h_new, c_new) in the same channel-major layout, so successive
    time steps never pay NCHW <-> channel-major transposes.
    """
    Cin, N, H, W = x_cm.shape
    Ch = h_cm.shape[0]
    G = 4 * Ch
    C = Cin + Ch
    KKC = K * K * C
    M = N * H * W
    out_dtype = x_cm.dtype
    op_dtype = jnp.bfloat16 if use_bf16 else jnp.float32
    op_bytes = jnp.dtype(op_dtype).itemsize

    # Contraction dim: 9 taps * C channels + 1 bias row, padded to 128.
    Kc = _round_up(KKC + 1, 128)

    TM = _pick_tile_m(M)
    Mp = _round_up(M, TM)
    TK = _pick_tile_k(Kc, TM, G, op_bytes, budget_bytes=24 * 1024 * 1024)

    # ---- patches built directly channel-major: (Kc, Mp). No (M, KKC) im2col
    # matrix, no big transpose.
    z = jnp.concatenate([x_cm, h_cm], axis=0).astype(op_dtype)   # (C, N, H, W)
    zp = jnp.pad(z, ((0, 0), (0, 0), (PAD, PAD), (PAD, PAD)))
    rows = [zp[:, :, kh:kh + H, kw:kw + W].reshape(C, M)
            for kh in range(K) for kw in range(K)]
    rows.append(jnp.ones((1, M), op_dtype))                      # bias row
    if Kc - KKC - 1 > 0:
        rows.append(jnp.zeros((Kc - KKC - 1, M), op_dtype))
    pT = jnp.concatenate(rows, axis=0)                           # (Kc, M)
    if Mp > M:
        pT = jnp.pad(pT, ((0, 0), (0, Mp - M)))
    # TODO(synk): for very large C*H*W, move this 9-tap gather fully into the
    # kernel (halo'd BlockSpec / manual make_async_copy) to also drop the 9x
    # patch stream from HBM.

    # ---- fused weights (G, Kc): [wx | wh] along input channels, bias on the
    # row matching pT's ones-row, zeros elsewhere. Tiny; transpose is cheap.
    wf = jnp.concatenate([wx, wh], axis=2).reshape(KKC, G)
    wf = jnp.concatenate([wf, b.reshape(1, G).astype(wf.dtype)], axis=0)
    wf = jnp.pad(wf, ((0, Kc - KKC - 1), (0, 0)))
    wT = wf.T.astype(op_dtype)                                   # (G, Kc)

    # ---- previous cell state: channels on sublanes, pixels on lanes.
    cT = c_cm.reshape(Ch, M)
    if Mp > M:
        cT = jnp.pad(cT, ((0, 0), (0, Mp - M)))

    m_tiles = Mp // TM
    k_tiles = Kc // TK

    c_bytes = jnp.dtype(cT.dtype).itemsize
    o_bytes = jnp.dtype(out_dtype).itemsize
    vmem_est = (2 * (TK * TM + G * TK) * op_bytes    # streamed blocks, 2-buf
                + 2 * Ch * TM * c_bytes              # c_prev block
                + 2 * 2 * Ch * TM * o_bytes          # two output blocks
                + G * TM * 4)                        # f32 accumulator
    vmem_limit = int(min(48 * 1024 * 1024,
                         max(32 * 1024 * 1024, 2 * vmem_est)))

    cost = pl.CostEstimate(
        flops=2 * G * Kc * Mp,
        transcendentals=5 * Ch * Mp,
        bytes_accessed=int(pT.size * op_bytes
                           + wT.size * op_bytes * (m_tiles if k_tiles > 1 else 1)
                           + cT.size * c_bytes
                           + 2 * Ch * Mp * o_bytes),
    )

    ht_t, ct_t = pl.pallas_call(
        convlstm_kernel,
        out_shape=(jax.ShapeDtypeStruct((Ch, Mp), out_dtype),
                   jax.ShapeDtypeStruct((Ch, Mp), out_dtype)),
        grid_spec=pltpu.PrefetchScalarGridSpec(
            num_scalar_prefetch=0,
            grid=(m_tiles, k_tiles),
            in_specs=[
                pl.BlockSpec((G, TK), lambda m, k: (0, k)),    # weights
                pl.BlockSpec((TK, TM), lambda m, k: (k, m)),   # patches
                pl.BlockSpec((Ch, TM), lambda m, k: (0, m)),   # c_prev
            ],
            out_specs=[
                pl.BlockSpec((Ch, TM), lambda m, k: (0, m)),   # h_t
                pl.BlockSpec((Ch, TM), lambda m, k: (0, m)),   # c_t
            ],
            scratch_shapes=[pltpu.VMEM((G, TM), jnp.float32)],
        ),
        compiler_params=pltpu.CompilerParams(
            dimension_semantics=("parallel", "arbitrary"),
            vmem_limit_bytes=vmem_limit),
        cost_estimate=cost,
    )(wT, pT, cT)

    h_new = ht_t[:, :M].reshape(Ch, N, H, W)
    c_new = ct_t[:, :M].reshape(Ch, N, H, W)
    return h_new, c_new


def conv_lstm_cell(x_nchw, h_nchw, c_nchw, wx, wh, b, *, use_bf16=True):
    """NCHW wrapper matching the PyTorch module's forward convention.

    The `state is None` branch of the torch module (host-side randn init) is
    not translated; pass the state explicitly.
    """
    x_cm = jnp.transpose(x_nchw, (1, 0, 2, 3))
    h_cm = jnp.transpose(h_nchw, (1, 0, 2, 3))
    c_cm = jnp.transpose(c_nchw, (1, 0, 2, 3))
    h_new, c_new = conv_lstm_cell_cm(x_cm, h_cm, c_cm, wx, wh, b,
                                     use_bf16=use_bf16)
    return (jnp.transpose(h_new, (1, 0, 2, 3)),
            jnp.transpose(c_new, (1, 0, 2, 3)))


def reference(x_nchw, h_nchw, c_nchw, wx, wh, b):
    """Pure-JAX reference (same math as the PyTorch forward)."""
    x = jnp.transpose(x_nchw, (0, 2, 3, 1))
    h = jnp.transpose(h_nchw, (0, 2, 3, 1))
    c = jnp.transpose(c_nchw, (0, 2, 3, 1))
    dn = ('NHWC', 'HWIO', 'NHWC')
    gx = jax.lax.conv_general_dilated(x, wx, (1, 1), 'SAME',
                                      dimension_numbers=dn) + b
    gh = jax.lax.conv_general_dilated(h, wh, (1, 1), 'SAME',
                                      dimension_numbers=dn)
    g = gx + gh
    Ch = h.shape[-1]
    i = jax.nn.sigmoid(g[..., 0 * Ch:1 * Ch])
    f = jax.nn.sigmoid(g[..., 1 * Ch:2 * Ch])
    ctil = jnp.tanh(g[..., 2 * Ch:3 * Ch])
    o = jax.nn.sigmoid(g[..., 3 * Ch:4 * Ch])
    cn = ctil * i + c * f
    hn = o * jnp.tanh(cn)
    return (jnp.transpose(hn, (0, 3, 1, 2)),
            jnp.transpose(cn, (0, 3, 1, 2)))


if __name__ == "__main__":
    # Small shapes consistent with the module's forward (Ch multiple of 8 keeps
    # the in-kernel gate slices sublane-aligned).
    N, Cin, Ch, H, W = 2, 4, 8, 16, 16
    G = 4 * Ch

    key = jax.random.PRNGKey(0)
    kx, kh, kc, kwx, kwh, kb = jax.random.split(key, 6)

    x = jax.random.normal(kx, (N, Cin, H, W), dtype=jnp.float32)
    h_prev = jax.random.normal(kh, (N, Ch, H, W), dtype=jnp.float32)
    c_prev = jax.random.normal(kc, (N, Ch, H, W), dtype=jnp.float32)

    # Deterministic synthetic parameters (fused [i, f, c, o] gate order, HWIO).
    wx = jax.random.normal(kwx, (K, K, Cin, G), dtype=jnp.float32) * 0.1
    wh = jax.random.normal(kwh, (K, K, Ch, G), dtype=jnp.float32) * 0.1
    b = jax.random.normal(kb, (G,), dtype=jnp.float32) * 0.1

    ht_ref_out, ct_ref_out = reference(x, h_prev, c_prev, wx, wh, b)

    # Default path: bf16 MXU operands, f32 accumulation / elementwise.
    ht, ct = conv_lstm_cell(x, h_prev, c_prev, wx, wh, b)
    ht, ct = jax.block_until_ready(ht), jax.block_until_ready(ct)
    assert ht.shape == (N, Ch, H, W) and ct.shape == (N, Ch, H, W)
    assert jnp.allclose(ht, ht_ref_out, atol=5e-2, rtol=5e-2)
    assert jnp.allclose(ct, ct_ref_out, atol=5e-2, rtol=5e-2)

    # Exact-math path: f32 MXU operands, tight tolerance.
    ht32, ct32 = conv_lstm_cell(x, h_prev, c_prev, wx, wh, b, use_bf16=False)
    ht32, ct32 = jax.block_until_ready(ht32), jax.block_until_ready(ct32)
    assert jnp.allclose(ht32, ht_ref_out, atol=1e-4, rtol=1e-4)
    assert jnp.allclose(ct32, ct_ref_out, atol=1e-4, rtol=1e-4)

    print("KERNEL_OK")
</pallas_src>

<mosaic_0001>
module attributes {stable_mosaic.version = 11 : i64} {
  func.func @convlstm_kernel(%arg0: i32, %arg1: i32, %arg2: memref<32x128xbf16, #tpu.memory_space<vmem>>, %arg3: memref<128x256xbf16, #tpu.memory_space<vmem>>, %arg4: memref<8x256xf32, #tpu.memory_space<vmem>>, %arg5: memref<8x256xf32, #tpu.memory_space<vmem>>, %arg6: memref<8x256xf32, #tpu.memory_space<vmem>>, %arg7: memref<32x256xf32, #tpu.memory_space<vmem>>) attributes {dimension_semantics = [#tpu.dimension_semantics<parallel>, #tpu.dimension_semantics<arbitrary>], iteration_bounds = array<i64: 2, 1>, scalar_prefetch = 0 : i64, scratch_operands = 1 : i64, tpu.core_type = #tpu.core_type<tc>, window_params = [{transform_indices = @transform_0, window_bounds = array<i64: 32, 128>}, {transform_indices = @transform_1, window_bounds = array<i64: 128, 256>}, {transform_indices = @transform_2, window_bounds = array<i64: 8, 256>}, {transform_indices = @transform_3, window_bounds = array<i64: 8, 256>}, {transform_indices = @transform_4, window_bounds = array<i64: 8, 256>}]} {
    %c0_i32 = arith.constant 0 : i32
    %0 = arith.cmpi eq, %arg1, %c0_i32 : i32
    %1 = arith.extui %0 : i1 to i32
    %c0_i32_0 = arith.constant 0 : i32
    %2 = arith.cmpi ne, %1, %c0_i32_0 : i32
    scf.if %2 {
      %cst_10 = arith.constant 0.000000e+00 : f32
      %12 = vector.broadcast %cst_10 : f32 to vector<32x256xf32>
      %c0_11 = arith.constant 0 : index
      %c0_12 = arith.constant 0 : index
      %13 = vector.load %arg7[%c0_11, %c0_12] : memref<32x256xf32, #tpu.memory_space<vmem>>, vector<32x256xf32>
      tpu.vector_store %arg7[%c0_11, %c0_12], %12 {strides = array<i32>} : memref<32x256xf32, #tpu.memory_space<vmem>>, vector<32x256xf32>,
    } else {
    }
    %c0 = arith.constant 0 : index
    %c0_1 = arith.constant 0 : index
    %3 = vector.load %arg7[%c0, %c0_1] : memref<32x256xf32, #tpu.memory_space<vmem>>, vector<32x256xf32>
    %c0_2 = arith.constant 0 : index
    %c0_3 = arith.constant 0 : index
    %4 = vector.load %arg2[%c0_2, %c0_3] : memref<32x128xbf16, #tpu.memory_space<vmem>>, vector<32x128xbf16>
    %c0_4 = arith.constant 0 : index
    %c0_5 = arith.constant 0 : index
    %5 = vector.load %arg3[%c0_4, %c0_5] : memref<128x256xbf16, #tpu.memory_space<vmem>>, vector<128x256xbf16>
    %cst = arith.constant dense<0.000000e+00> : vector<32x256xf32>
    %6 = tpu.matmul %4, %5, %cst {dimension_numbers = #tpu.dot_dimension_numbers<[1], [0], [0], [1], [0, 0, 1, 1], [], []>} : vector<32x128xbf16>, vector<128x256xbf16>, vector<32x256xf32> -> vector<32x256xf32>
    %7 = arith.addf %3, %6 : vector<32x256xf32>
    %c0_6 = arith.constant 0 : index
    %c0_7 = arith.constant 0 : index
    %8 = vector.load %arg7[%c0_6, %c0_7] : memref<32x256xf32, #tpu.memory_space<vmem>>, vector<32x256xf32>
    tpu.vector_store %arg7[%c0_6, %c0_7], %7 {strides = array<i32>} : memref<32x256xf32, #tpu.memory_space<vmem>>, vector<32x256xf32>,
    %c0_i32_8 = arith.constant 0 : i32
    %9 = arith.cmpi eq, %arg1, %c0_i32_8 : i32
    %10 = arith.extui %9 : i1 to i32
    %c0_i32_9 = arith.constant 0 : i32
    %11 = arith.cmpi ne, %10, %c0_i32_9 : i32
    scf.if %11 {
      %c0_10 = arith.constant 0 : index
      %c0_11 = arith.constant 0 : index
      %12 = vector.load %arg7[%c0_10, %c0_11] : memref<32x256xf32, #tpu.memory_space<vmem>>, vector<32x256xf32>
      %13 = vector.extract_strided_slice %12 {offsets = [0, 0], sizes = [8, 256], strides = [1, 1]} : vector<32x256xf32> to vector<8x256xf32>
      %cst_12 = arith.constant 5.000000e-01 : f32
      %14 = vector.broadcast %cst_12 : f32 to vector<8x256xf32>
      %15 = arith.mulf %14, %13 : vector<8x256xf32>
      %16 = math.tanh %15 : vector<8x256xf32>
      %cst_13 = arith.constant 1.000000e+00 : f32
      %17 = vector.broadcast %cst_13 : f32 to vector<8x256xf32>
      %18 = arith.addf %16, %17 : vector<8x256xf32>
      %cst_14 = arith.constant 5.000000e-01 : f32
      %19 = vector.broadcast %cst_14 : f32 to vector<8x256xf32>
      %20 = arith.mulf %19, %18 : vector<8x256xf32>
      %21 = vector.extract_strided_slice %12 {offsets = [8, 0], sizes = [8, 256], strides = [1, 1]} : vector<32x256xf32> to vector<8x256xf32>
      %cst_15 = arith.constant 5.000000e-01 : f32
      %22 = vector.broadcast %cst_15 : f32 to vector<8x256xf32>
      %23 = arith.mulf %22, %21 : vector<8x256xf32>
      %24 = math.tanh %23 : vector<8x256xf32>
      %cst_16 = arith.constant 1.000000e+00 : f32
      %25 = vector.broadcast %cst_16 : f32 to vector<8x256xf32>
      %26 = arith.addf %24, %25 : vector<8x256xf32>
      %cst_17 = arith.constant 5.000000e-01 : f32
      %27 = vector.broadcast %cst_17 : f32 to vector<8x256xf32>
      %28 = arith.mulf %27, %26 : vector<8x256xf32>
      %29 = vector.extract_strided_slice %12 {offsets = [16, 0], sizes = [8, 256], strides = [1, 1]} : vector<32x256xf32> to vector<8x256xf32>
      %30 = math.tanh %29 : vector<8x256xf32>
      %31 = vector.extract_strided_slice %12 {offsets = [24, 0], sizes = [8, 256], strides = [1, 1]} : vector<32x256xf32> to vector<8x256xf32>
      %cst_18 = arith.constant 5.000000e-01 : f32
      %32 = vector.broadcast %cst_18 : f32 to vector<8x256xf32>
      %33 = arith.mulf %32, %31 : vector<8x256xf32>
      %34 = math.tanh %33 : vector<8x256xf32>
      %cst_19 = arith.constant 1.000000e+00 : f32
      %35 = vector.broadcast %cst_19 : f32 to vector<8x256xf32>
      %36 = arith.addf %34, %35 : vector<8x256xf32>
      %cst_20 = arith.constant 5.000000e-01 : f32
      %37 = vector.broadcast %cst_20 : f32 to vector<8x256xf32>
      %38 = arith.mulf %37, %36 : vector<8x256xf32>
      %c0_21 = arith.constant 0 : index
      %c0_22 = arith.constant 0 : index
      %39 = vector.load %arg4[%c0_21, %c0_22] : memref<8x256xf32, #tpu.memory_space<vmem>>, vector<8x256xf32>
      %40 = arith.mulf %30, %20 : vector<8x256xf32>
      %41 = arith.mulf %39, %28 : vector<8x256xf32>
      %42 = arith.addf %40, %41 : vector<8x256xf32>
      %43 = math.tanh %42 : vector<8x256xf32>
      %44 = arith.mulf %38, %43 : vector<8x256xf32>
      %c0_23 = arith.constant 0 : index
      %c0_24 = arith.constant 0 : index
      %45 = vector.load %arg6[%c0_23, %c0_24] : memref<8x256xf32, #tpu.memory_space<vmem>>, vector<8x256xf32>
      tpu.vector_store %arg6[%c0_23, %c0_24], %42 {strides = array<i32>} : memref<8x256xf32, #tpu.memory_space<vmem>>, vector<8x256xf32>,
      %c0_25 = arith.constant 0 : index
      %c0_26 = arith.constant 0 : index
      %46 = vector.load %arg5[%c0_25, %c0_26] : memref<8x256xf32, #tpu.memory_space<vmem>>, vector<8x256xf32>
      tpu.vector_store %arg5[%c0_25, %c0_26], %44 {strides = array<i32>} : memref<8x256xf32, #tpu.memory_space<vmem>>, vector<8x256xf32>,
    } else {
    }
    return
  }
  func.func @transform_0(%arg0: i32, %arg1: i32) -> (i32, i32) {
    %c0_i32 = arith.constant 0 : i32
    %c0_i32_0 = arith.constant 0 : i32
    return %c0_i32, %arg1 : i32, i32
  }
  func.func @transform_1(%arg0: i32, %arg1: i32) -> (i32, i32) {
    %c0_i32 = arith.constant 0 : i32
    return %arg1, %arg0 : i32, i32
  }
  func.func @transform_2(%arg0: i32, %arg1: i32) -> (i32, i32) {
    %c0_i32 = arith.constant 0 : i32
    %c0_i32_0 = arith.constant 0 : i32
    return %c0_i32, %arg0 : i32, i32
  }
  func.func @transform_3(%arg0: i32, %arg1: i32) -> (i32, i32) {
    %c0_i32 = arith.constant 0 : i32
    %c0_i32_0 = arith.constant 0 : i32
    return %c0_i32, %arg0 : i32, i32
  }
  func.func @transform_4(%arg0: i32, %arg1: i32) -> (i32, i32) {
    %c0_i32 = arith.constant 0 : i32
    %c0_i32_0 = arith.constant 0 : i32
    return %c0_i32, %arg0 : i32, i32
  }
}

</mosaic_0001>

<llo_original>
// kernel: tpu_custom_call.1
$region0: #{tpu_custom_call.1}
  #allocation0 [shape = 'u32[]', space=smem, size = 0x4, offset = 0x4, fixed_abs, tag = 'smem constant byte address 0x4 - core index']
  #allocation1 [shape = 'u32[144,128]{1,0:T(1,128)}', space=vmem, size = 0x12000, scoped, tag = 'internal scratch']
  #allocation2 [shape = 'f32[32,256]{1,0:T(8,128)}', space=vmem, size = 0x8000, scoped, tag = 'scratch operand']
  %s0 = inlined_call_operand.hbm [shape: bf16[32,128], index: 0, kind: input, shape index: {}]
  %s1 = inlined_call_operand.hbm [shape: bf16[128,512], index: 1, kind: input, shape index: {}]
  %s2 = inlined_call_operand.hbm [shape: f32[8,512], index: 2, kind: input, shape index: {}]
  %s3 = inlined_call_operand.hbm [shape: f32[8,512], index: 3, kind: output, shape index: {0}]
  %s4 = inlined_call_operand.hbm [shape: f32[8,512], index: 4, kind: output, shape index: {1}]
  %5 = xla_tuple %s3, %s4
  %s6 = sld [smem:[#allocation0]]
  $region73: #{tpu_custom_call.1} parent=0
    _
  %s8 = ssub.s32 1, %s6
  %s9 = scalar_select 0, %s8, %s6
  $region1: #{tpu_custom_call.1} parent=0
    #allocation3 [shape = 'u8[8192]{0}', space=vmem, size = 0x2000, scoped, tag = 'input window, operand 0, single buffered']
    #allocation4 [shape = 's32[2]{0}', space=sflag, size = 0x8, scoped, tag = 'scoped memory for tpu_custom_call.1']
    #allocation5 [shape = 's32[2]{0}', space=sflag, size = 0x8, scoped, tag = 'scoped memory for tpu_custom_call.1']
    #allocation6 [shape = 'u8[131072]{0}', space=vmem, size = 0x20000, scoped, tag = 'input window, operand 1']
    #allocation7 [shape = 's32[2]{0}', space=sflag, size = 0x8, scoped, tag = 'scoped memory for tpu_custom_call.1']
    #allocation8 [shape = 'u8[16384]{0}', space=vmem, size = 0x4000, scoped, tag = 'input window, operand 2']
    #allocation9 [shape = 'u8[16384]{0}', space=vmem, size = 0x4000, scoped, tag = 'output window, operand 0']
    #allocation10 [shape = 'u8[16384]{0}', space=vmem, size = 0x4000, scoped, tag = 'output window, operand 1']
    #allocation11 [shape = 's32[2]{0}', space=sflag, size = 0x8, scoped, tag = 'scoped memory for tpu_custom_call.1']
    %10 = vsyncpa [#allocation4], 0
    %11 = vsyncpa [#allocation7], 0
    %s12 = scalar_lea.sflag [#allocation7], 1
    %13 = vsyncpa %s12, 0
    %14 = vsyncpa [#allocation5], 0
    %s15 = scalar_lea.sflag [#allocation5], 1
    %16 = vsyncpa %s15, 0
    %17 = vsyncpa [#allocation11], 0
    %s18 = scalar_lea.sflag [#allocation11], 1
    %19 = vsyncpa %s18, 0
    loop: start=0, step=1, limit=4
    $region2: #{tpu_custom_call.1} parent=1 // loop_pre_header
      _
    $region3: #{tpu_custom_call.1} parent=1 // loop_header
      %s21 = sphi 0, %s25
      %p22 = scmp.ge.s32.totalorder %s21, 4
      %s28 = sphi 0, %s40
      %s29 = sphi 0, %s36
      %s30 = sphi 0, %s28
      %s31 = sphi 0, %s29
      %s32 = sphi 0, %s30
      %s33 = sphi 0, %s31
      %s43 = sphi 0, %s45
      %s46 = sphi 0, %s43
      %s47 = sphi 0, %s46
      %s63 = sphi 0, %s47
      %s71 = sphi 0, %s73
      %s74 = sphi 0, %s71
      %s75 = sphi 0, %s74
      %s91 = sphi 0, %s75
      %s97 = sphi 0, %s99
      %s100 = sphi 0, %s97
      %s101 = sphi 0, %s100
      %s117 = sphi 0, %s101
      %s123 = sphi 0, %s125
      %s126 = sphi 0, %s123
      %s127 = sphi 0, %s126
      %s143 = sphi 0, %s127
      %s149 = sphi 0, %s151
      %s152 = sphi 0, %s149
      %s153 = sphi 0, %s152
      %s169 = sphi 0, %s153
    $region4: #{tpu_custom_call.1} parent=1 // loop_header_branch
      %24 = sbr.rel (%p22) target = $region8
    $region5: #{tpu_custom_call.1} parent=1 // loop_body
      %s26 = ssub.s32 %s21, 1
      %s27 = ssub.s32 %s21, 2
      %s34 = sadd.s32 1, %s29
      %p35 = scmp.ge.s32.totalorder %s34, 1
      %s36 = scalar_select %p35, 0, %s34
      %s37 = sadd.s32 1, %s28
      %s38 = scalar_select %p35, %s37, %s28
      %p39 = scmp.ge.s32.totalorder %s38, 2
      %s40 = scalar_select %p39, 0, %s38
      %s41 = ssub.s32 %s29, %s36
      %p42 = scmp.eq.s32.totalorder %s41, 0
      %s44 = sadd.s32 %s43, 1
      %s45 = scalar_select %p42, %s43, %s44
      %p48 = pneg %p42
      %p49 = scmp.eq.s32.totalorder %s21, 1
      %p50 = por %p48, %p49
      %p51 = scmp.ne.s32.totalorder %s43, %s46
      %p52 = scmp.eq.s32.totalorder %s21, 0
      %p53 = por %p51, %p52
      %p54 = scmp.ne.s32.totalorder %s43, %s46
      %p55 = scmp.eq.s32.totalorder %s26, 1
      %p56 = por %p54, %p55
      %p57 = scmp.ne.s32.totalorder %s46, %s47
      %p58 = scmp.eq.s32.totalorder %s26, 0
      %p59 = por %p57, %p58
      %p60 = scmp.ne.s32.totalorder %s46, %s47
      %p61 = scmp.eq.s32.totalorder %s27, 1
      %p62 = por %p60, %p61
      %p64 = scmp.ne.s32.totalorder %s47, %s63
      %p65 = scmp.eq.s32.totalorder %s27, 0
      %p66 = por %p64, %p65
      %s67 = ssub.s32 %s29, %s36
      %s68 = ssub.s32 %s28, %s40
      %s69 = sor.u32 %s67, %s68
      %p70 = scmp.eq.s32.totalorder %s69, 0
      %s72 = sadd.s32 %s71, 1
      %s73 = scalar_select %p70, %s71, %s72
      %p76 = pneg %p70
      %p77 = scmp.eq.s32.totalorder %s21, 1
      %p78 = por %p76, %p77
      %p79 = scmp.ne.s32.totalorder %s71, %s74
      %p80 = scmp.eq.s32.totalorder %s21, 0
      %p81 = por %p79, %p80
      %p82 = scmp.ne.s32.totalorder %s71, %s74
      %p83 = scmp.eq.s32.totalorder %s26, 1
      %p84 = por %p82, %p83
      %p85 = scmp.ne.s32.totalorder %s74, %s75
      %p86 = scmp.eq.s32.totalorder %s26, 0
      %p87 = por %p85, %p86
      %p88 = scmp.ne.s32.totalorder %s74, %s75
      %p89 = scmp.eq.s32.totalorder %s27, 1
      %p90 = por %p88, %p89
      %p92 = scmp.ne.s32.totalorder %s75, %s91
      %p93 = scmp.eq.s32.totalorder %s27, 0
      %p94 = por %p92, %p93
      %s95 = ssub.s32 %s28, %s40
      %p96 = scmp.eq.s32.totalorder %s95, 0
      %s98 = sadd.s32 %s97, 1
      %s99 = scalar_select %p96, %s97, %s98
      %p102 = pneg %p96
      %p103 = scmp.eq.s32.totalorder %s21, 1
      %p104 = por %p102, %p103
      %p105 = scmp.ne.s32.totalorder %s97, %s100
      %p106 = scmp.eq.s32.totalorder %s21, 0
      %p107 = por %p105, %p106
      %p108 = scmp.ne.s32.totalorder %s97, %s100
      %p109 = scmp.eq.s32.totalorder %s26, 1
      %p110 = por %p108, %p109
      %p111 = scmp.ne.s32.totalorder %s100, %s101
      %p112 = scmp.eq.s32.totalorder %s26, 0
      %p113 = por %p111, %p112
      %p114 = scmp.ne.s32.totalorder %s100, %s101
      %p115 = scmp.eq.s32.totalorder %s27, 1
      %p116 = por %p114, %p115
      %p118 = scmp.ne.s32.totalorder %s101, %s117
      %p119 = scmp.eq.s32.totalorder %s27, 0
      %p120 = por %p118, %p119
      %s121 = ssub.s32 %s28, %s40
      %p122 = scmp.eq.s32.totalorder %s121, 0
      %s124 = sadd.s32 %s123, 1
      %s125 = scalar_select %p122, %s123, %s124
      %p128 = pneg %p122
      %p129 = scmp.eq.s32.totalorder %s21, 1
      %p130 = por %p128, %p129
      %p131 = scmp.ne.s32.totalorder %s123, %s126
      %p132 = scmp.eq.s32.totalorder %s21, 0
      %p133 = por %p131, %p132
      %p134 = scmp.ne.s32.totalorder %s123, %s126
      %p135 = scmp.eq.s32.totalorder %s26, 1
      %p136 = por %p134, %p135
      %p137 = scmp.ne.s32.totalorder %s126, %s127
      %p138 = scmp.eq.s32.totalorder %s26, 0
      %p139 = por %p137, %p138
      %p140 = scmp.ne.s32.totalorder %s126, %s127
      %p141 = scmp.eq.s32.totalorder %s27, 1
      %p142 = por %p140, %p141
      %p144 = scmp.ne.s32.totalorder %s127, %s143
      %p145 = scmp.eq.s32.totalorder %s27, 0
      %p146 = por %p144, %p145
      %s147 = ssub.s32 %s28, %s40
      %p148 = scmp.eq.s32.totalorder %s147, 0
      %s150 = sadd.s32 %s149, 1
      %s151 = scalar_select %p148, %s149, %s150
      %p154 = pneg %p148
      %p155 = scmp.eq.s32.totalorder %s21, 1
      %p156 = por %p154, %p155
      %p157 = scmp.ne.s32.totalorder %s149, %s152
      %p158 = scmp.eq.s32.totalorder %s21, 0
      %p159 = por %p157, %p158
      %p160 = scmp.ne.s32.totalorder %s149, %s152
      %p161 = scmp.eq.s32.totalorder %s26, 1
      %p162 = por %p160, %p161
      %p163 = scmp.ne.s32.totalorder %s152, %s153
      %p164 = scmp.eq.s32.totalorder %s26, 0
      %p165 = por %p163, %p164
      %p166 = scmp.ne.s32.totalorder %s152, %s153
      %p167 = scmp.eq.s32.totalorder %s27, 1
      %p168 = por %p166, %p167
      %p170 = scmp.ne.s32.totalorder %s153, %s169
      %p171 = scmp.eq.s32.totalorder %s27, 0
      %p172 = por %p170, %p171
      %p173 = scmp.le.s32.totalorder 1, %s21
      %p174 = scmp.lt.s32.totalorder %s21, 3
      %p175 = pnand %p173, %p174
      %p176 = pneg %p175
      // Predicated region
      $region9: #{tpu_custom_call.1} parent=5 // pred_check
        _
      $region10: #{tpu_custom_call.1} parent=5 // pred_check_branch
        %178 = sbr.rel (%p175) target = $region12
      $region11: #{tpu_custom_call.1} parent=5 // pred_region
        %s179 = ssub.s32 %s21, 1
        // Predicated region
        $region13: #{tpu_custom_call.1} parent=11 // pred_check
          %p180 = pneg %p59
        $region14: #{tpu_custom_call.1} parent=11 // pred_check_branch
          %182 = sbr.rel (%p180) target = $region16
        $region15: #{tpu_custom_call.1} parent=11 // pred_region
          %s184 = ssub.s32 256, 256
          %185 = vsyncadd [#allocation4], %s184
          %s186 = smul.addr %s31, 64
          %s187 = scalar_lea.hbm %s0, %s186
          %s188 = sshll.u32 [#allocation3], 4
          %s189 = int_to_ptr.vmem [resolvable:$true] %s188
          %194 = dma.hbm_to_vmem [thread:$0]  %s187, 256, %s189, [#allocation4], 64, 64, 4
        $region16: #{tpu_custom_call.1} parent=11 // pred_fallthru
          _
      $region12: #{tpu_custom_call.1} parent=5 // pred_fallthru
        _
      %p195 = scmp.lt.s32.totalorder %s21, 2
      // Predicated region
      $region17: #{tpu_custom_call.1} parent=5 // pred_check
        %p196 = pneg %p195
      $region18: #{tpu_custom_call.1} parent=5 // pred_check_branch
        %198 = sbr.rel (%p196) target = $region20
      $region19: #{tpu_custom_call.1} parent=5 // pred_region
        // Predicated region
        $region21: #{tpu_custom_call.1} parent=19 // pred_check
          %p199 = pneg %p81
        $region22: #{tpu_custom_call.1} parent=19 // pred_check_branch
          %201 = sbr.rel (%p199) target = $region24
        $region23: #{tpu_custom_call.1} parent=19 // pred_region
          %s202 = sand.u32 %s21, 1
          %s203 = scalar_lea.sflag [#allocation7], %s202
          %s204 = sand.u32 %s71, 1
          %s205 = smul.addr %s204, 128
          %s206 = scalar_lea.vmem [#allocation6], %s205
          %s207 = smul.u32 16, %s29
          %s208 = smul.u32 2, %s28
          %s210 = ssub.s32 2048, 2048
          %211 = vsyncadd %s203, %s210
          %s212 = smul.addr %s207, 4
          %s213 = sadd.s32 %s208, %s212
          %s214 = smul.addr %s213, 64
          %s215 = scalar_lea.hbm %s1, %s214
          %s216 = sshll.u32 %s206, 4
          %s217 = int_to_ptr.vmem [resolvable:$true] %s216
          %222 = dma.hbm_to_vmem [thread:$0]  %s215, 2048, %s217, %s203, 256, 128, 8
        $region24: #{tpu_custom_call.1} parent=19 // pred_fallthru
          _
        // Predicated region
        $region25: #{tpu_custom_call.1} parent=19 // pred_check
          %p223 = pneg %p107
        $region26: #{tpu_custom_call.1} parent=19 // pred_check_branch
          %225 = sbr.rel (%p223) target = $region28
        $region27: #{tpu_custom_call.1} parent=19 // pred_region
          %s226 = sand.u32 %s21, 1
          %s227 = scalar_lea.sflag [#allocation7], %s226
          %s228 = sand.u32 %s97, 1
          %s229 = smul.addr %s228, 16
          %s230 = scalar_lea.vmem [#allocation8], %s229
          %s231 = smul.u32 2, %s28
          %s233 = ssub.s32 256, 256
          %234 = vsyncadd %s227, %s233
          %s235 = smul.addr %s231, 128
          %s236 = scalar_lea.hbm %s2, %s235
          %s238 = sshll.u32 %s230, 4
          %s239 = int_to_ptr.vmem [resolvable:$true] %s238
          %241 = dma.hbm_to_vmem [thread:$0]  %s236, 256, %s239, %s227
        $region28: #{tpu_custom_call.1} parent=19 // pred_fallthru
          _
      $region20: #{tpu_custom_call.1} parent=5 // pred_fallthru
        _
      %p242 = scmp.le.s32.totalorder 1, %s21
      %p243 = scmp.lt.s32.totalorder %s21, 3
      %p244 = pnand %p242, %p243
      %p245 = pneg %p244
      // Predicated region
      $region29: #{tpu_custom_call.1} parent=5 // pred_check
        _
      $region30: #{tpu_custom_call.1} parent=5 // pred_check_branch
        %247 = sbr.rel (%p244) target = $region32
      $region31: #{tpu_custom_call.1} parent=5 // pred_region
        %s248 = ssub.s32 %s21, 1
        // Predicated region
        $region33: #{tpu_custom_call.1} parent=31 // pred_check
          %p249 = pneg %p59
        $region34: #{tpu_custom_call.1} parent=31 // pred_check_branch
          %251 = sbr.rel (%p249) target = $region36
        $region35: #{tpu_custom_call.1} parent=31 // pred_region
          %252 = dma.done [#allocation4], 256
        $region36: #{tpu_custom_call.1} parent=31 // pred_fallthru
          _
        %s253 = sand.u32 %s26, 1
        %s254 = scalar_lea.sflag [#allocation7], %s253
        %s255 = sand.u32 %s74, 1
        %s256 = smul.addr %s255, 128
        %s257 = scalar_lea.vmem [#allocation6], %s256
        // Predicated region
        $region37: #{tpu_custom_call.1} parent=31 // pred_check
          %p258 = pneg %p87
        $region38: #{tpu_custom_call.1} parent=31 // pred_check_branch
          %260 = sbr.rel (%p258) target = $region40
        $region39: #{tpu_custom_call.1} parent=31 // pred_region
          %261 = dma.done %s254, 2048
        $region40: #{tpu_custom_call.1} parent=31 // pred_fallthru
          _
        %s262 = sand.u32 %s26, 1
        %s263 = scalar_lea.sflag [#allocation7], %s262
        %s264 = sand.u32 %s100, 1
        %s265 = smul.addr %s264, 16
        %s266 = scalar_lea.vmem [#allocation8], %s265
        // Predicated region
        $region41: #{tpu_custom_call.1} parent=31 // pred_check
          %p267 = pneg %p113
        $region42: #{tpu_custom_call.1} parent=31 // pred_check_branch
          %269 = sbr.rel (%p267) target = $region44
        $region43: #{tpu_custom_call.1} parent=31 // pred_region
          %270 = dma.done %s263, 256
        $region44: #{tpu_custom_call.1} parent=31 // pred_fallthru
          _
        %p271 = pneg %p59
        %p272 = pneg %p56
        %s273 = sand.u32 %s26, 1
        %s274 = scalar_lea.sflag [#allocation7], %s273
        %s275 = sand.u32 %s74, 1
        %s276 = smul.addr %s275, 128
        %s277 = scalar_lea.vmem [#allocation6], %s276
        %p278 = pneg %p87
        %p279 = pneg %p84
        %s280 = sand.u32 %s26, 1
        %s281 = scalar_lea.sflag [#allocation7], %s280
        %s282 = sand.u32 %s100, 1
        %s283 = smul.addr %s282, 16
        %s284 = scalar_lea.vmem [#allocation8], %s283
        %p285 = pneg %p113
        %p286 = pneg %p110
        %p287 = pneg %p139
        %p288 = pneg %p136
        %s289 = sand.u32 %s126, 1
        %s290 = scalar_lea.sflag [#allocation5], %s289
        %s291 = sand.u32 %s126, 1
        %s292 = smul.addr %s291, 16
        %s293 = scalar_lea.vmem [#allocation9], %s292
        %p294 = pneg %p165
        %p295 = pneg %p162
        %s296 = sand.u32 %s152, 1
        %s297 = scalar_lea.sflag [#allocation11], %s296
        %s298 = sand.u32 %s152, 1
        %s299 = smul.addr %s298, 16
        %s300 = scalar_lea.vmem [#allocation10], %s299
        %s301 = smul.u32 16, %s31
        %s302 = smul.u32 2, %s30
        %s303 = smul.u32 2, %s30
        %s304 = smul.u32 2, %s30
        %s305 = smul.u32 2, %s30
        %p307 = scmp.eq.s32.totalorder %s31, 0
        // Predicated region
        $region45: #{tpu_custom_call.1} parent=31 // pred_check
          %p308 = pneg %p307
        $region46: #{tpu_custom_call.1} parent=31 // pred_check_branch
          %310 = sbr.rel (%p308) target = $region48
        $region47: #{tpu_custom_call.1} parent=31 // pred_region
          %311 = vst [vmem:[#allocation2] sm:$0xff] 0.0
          %312 = vst [vmem:[#allocation2 + $0x8] sm:$0xff] 0.0
          %313 = vst [vmem:[#allocation2 + $0x10] sm:$0xff] 0.0
          %314 = vst [vmem:[#allocation2 + $0x18] sm:$0xff] 0.0
          %315 = vst [vmem:[#allocation2 + $0x20] sm:$0xff] 0.0
          %316 = vst [vmem:[#allocation2 + $0x28] sm:$0xff] 0.0
          %317 = vst [vmem:[#allocation2 + $0x30] sm:$0xff] 0.0
          %318 = vst [vmem:[#allocation2 + $0x38] sm:$0xff] 0.0
        $region48: #{tpu_custom_call.1} parent=31 // pred_fallthru
          _
        %v319 = vld [vmem:[#allocation2] sm:$0xff]
        %v320 = vld [vmem:[#allocation2 + $0x8] sm:$0xff]
        %v321 = vld [vmem:[#allocation2 + $0x10] sm:$0xff]
        %v322 = vld [vmem:[#allocation2 + $0x18] sm:$0xff]
        %v323 = vld [vmem:[#allocation2 + $0x20] sm:$0xff]
        %v324 = vld [vmem:[#allocation2 + $0x28] sm:$0xff]
        %v325 = vld [vmem:[#allocation2 + $0x30] sm:$0xff]
        %v326 = vld [vmem:[#allocation2 + $0x38] sm:$0xff]
        %v327 = vld [vmem:[#allocation3] sm:$0xf]
        %v328 = vld [vmem:[#allocation3 + $0x4] sm:$0xf]
        %v329 = vld [vmem:[#allocation3 + $0x8] sm:$0xf]
        %v330 = vld [vmem:[#allocation3 + $0xc] sm:$0xf]
        %v331 = vld [vmem:[%s257] sm:$0xff]
        %v332 = vld [vmem:[%s257 + $0x8] sm:$0xff]
        %v333 = vld [vmem:[%s257 + $0x10] sm:$0xff]
        %v334 = vld [vmem:[%s257 + $0x18] sm:$0xff]
        %v335 = vld [vmem:[%s257 + $0x20] sm:$0xff]
        %v336 = vld [vmem:[%s257 + $0x28] sm:$0xff]
        %v337 = vld [vmem:[%s257 + $0x30] sm:$0xff]
        %v338 = vld [vmem:[%s257 + $0x38] sm:$0xff]
        %v339 = vld [vmem:[%s257 + $0x40] sm:$0xff]
        %v340 = vld [vmem:[%s257 + $0x48] sm:$0xff]
        %v341 = vld [vmem:[%s257 + $0x50] sm:$0xff]
        %v342 = vld [vmem:[%s257 + $0x58] sm:$0xff]
        %v343 = vld [vmem:[%s257 + $0x60] sm:$0xff]
        %v344 = vld [vmem:[%s257 + $0x68] sm:$0xff]
        %v345 = vld [vmem:[%s257 + $0x70] sm:$0xff]
        %v346 = vld [vmem:[%s257 + $0x78] sm:$0xff]
        %v351 = vunpack.c.l.b16 %v327
        %v352 = vunpack.c.l.b16 %v328
        %v353 = vunpack.c.l.b16 %v329
        %v354 = vunpack.c.l.b16 %v330
        %v355 = vpack.c.b16 %v352, %v351
        %v356 = vpack.c.b16 %v354, %v353
        %v375 = vunpack.c.l.b16 %v331
        %v376 = vunpack.c.h.b16 %v331
        %v377 = vunpack.c.l.b16 %v332
        %v378 = vunpack.c.h.b16 %v332
        %v379 = vunpack.c.l.b16 %v333
        %v380 = vunpack.c.h.b16 %v333
        %v381 = vunpack.c.l.b16 %v334
        %v382 = vunpack.c.h.b16 %v334
        %v383 = vunpack.c.l.b16 %v335
        %v384 = vunpack.c.h.b16 %v335
        %v385 = vunpack.c.l.b16 %v336
        %v386 = vunpack.c.h.b16 %v336
        %v387 = vunpack.c.l.b16 %v337
        %v388 = vunpack.c.h.b16 %v337
        %v389 = vunpack.c.l.b16 %v338
        %v390 = vunpack.c.h.b16 %v338
        %v391 = vunpack.c.l.b16 %v339
        %v392 = vunpack.c.h.b16 %v339
        %v393 = vunpack.c.l.b16 %v340
        %v394 = vunpack.c.h.b16 %v340
        %v395 = vunpack.c.l.b16 %v341
        %v396 = vunpack.c.h.b16 %v341
        %v397 = vunpack.c.l.b16 %v342
        %v398 = vunpack.c.h.b16 %v342
        %v399 = vunpack.c.l.b16 %v343
        %v400 = vunpack.c.h.b16 %v343
        %v401 = vunpack.c.l.b16 %v344
        %v402 = vunpack.c.h.b16 %v344
        %v403 = vunpack.c.l.b16 %v345
        %v404 = vunpack.c.h.b16 %v345
        %v405 = vunpack.c.l.b16 %v346
        %v406 = vunpack.c.h.b16 %v346
        %v407 = vpack.c.b16 %v377, %v375
        %v408 = vpack.c.b16 %v378, %v376
        %v409 = vpack.c.b16 %v381, %v379
        %v410 = vpack.c.b16 %v382, %v380
        %v411 = vpack.c.b16 %v385, %v383
        %v412 = vpack.c.b16 %v386, %v384
        %v413 = vpack.c.b16 %v389, %v387
        %v414 = vpack.c.b16 %v390, %v388
        %v415 = vpack.c.b16 %v393, %v391
        %v416 = vpack.c.b16 %v394, %v392
        %v417 = vpack.c.b16 %v397, %v395
        %v418 = vpack.c.b16 %v398, %v396
        %v419 = vpack.c.b16 %v401, %v399
        %v420 = vpack.c.b16 %v402, %v400
        %v421 = vpack.c.b16 %v405, %v403
        %v422 = vpack.c.b16 %v406, %v404
        %439 = vmatprep.subr.bf16.mxu0 %v408
        %440 = vmatpush1.bf16.msra.mxu0 %v407
        %441 = vmatprep.subr.bf16.mxu0 %v410
        %442 = vmatpush1.bf16.msra.mxu0 %v409
        %443 = vmatprep.subr.bf16.mxu0 %v412
        %444 = vmatpush1.bf16.msra.mxu0 %v411
        %445 = vmatprep.subr.bf16.mxu0 %v414
        %446 = vmatpush1.bf16.msra.mxu0 %v413
        %447 = vmatprep.subr.bf16.mxu0 %v416
        %448 = vmatpush1.bf16.msra.mxu0 %v415
        %449 = vmatprep.subr.bf16.mxu0 %v418
        %450 = vmatpush1.bf16.msra.mxu0 %v417
        %451 = vmatprep.subr.bf16.mxu0 %v420
        %452 = vmatpush1.bf16.msra.mxu0 %v419
        %453 = vmatprep.subr.bf16.mxu0 %v422
        %454 = vmatpush1.bf16.msra.mxu0 %v421
        %455 = vmatprep.subr.bf16.mxu0 0
        %456 = vmatpush1.bf16.msra.mxu0 0
        %457 = vmatprep.subr.bf16.mxu0 0
        %458 = vmatpush1.bf16.msra.mxu0 0
        %459 = vmatprep.subr.bf16.mxu0 0
        %460 = vmatpush1.bf16.msra.mxu0 0
        %461 = vmatprep.subr.bf16.mxu0 0
        %462 = vmatpush1.bf16.msra.mxu0 0
        %463 = vmatprep.subr.bf16.mxu0 0
        %464 = vmatpush1.bf16.msra.mxu0 0
        %465 = vmatprep.subr.bf16.mxu0 0
        %466 = vmatpush1.bf16.msra.mxu0 0
        %467 = vmatprep.subr.bf16.mxu0 0
        %468 = vmatpush1.bf16.msra.mxu0 0
        %469 = vmatprep.subr.bf16.mxu0 0
        %470 = vmatpush1.bf16.msra.mxu0 0
        %471 = vmatprep.mubr.bf16.mxu0 0
        %472 = vmatmul.mubr.bf16.gmra.mrb[0].mxu0 %v355
        %v473 = vpop.f32.mrb[0].mxu0
        %v474 = vadd.f32 0.0, %v473
        %v475 = vpop.f32.mrb[0].mxu0
        %v476 = vadd.f32 0.0, %v475
        %v477 = vpop.f32.mrb[0].mxu0
        %v478 = vadd.f32 0.0, %v477
        %v479 = vpop.f32.mrb[0].mxu0
        %v480 = vadd.f32 0.0, %v479
        %481 = vmatprep.mubr.bf16.mxu0 0
        %482 = vmatmul.mubr.bf16.gmra.mrb[0].mxu0 %v356
        %v483 = vpop.f32.mrb[0].mxu0
        %v484 = vadd.f32 0.0, %v483
        %v485 = vpop.f32.mrb[0].mxu0
        %v486 = vadd.f32 0.0, %v485
        %v487 = vpop.f32.mrb[0].mxu0
        %v488 = vadd.f32 0.0, %v487
        %v489 = vpop.f32.mrb[0].mxu0
        %v490 = vadd.f32 0.0, %v489
        %491 = vdwg.mxu0
        %v492 = vadd.f32 %v319, %v474
        %v493 = vadd.f32 %v320, %v476
        %v494 = vadd.f32 %v321, %v478
        %v495 = vadd.f32 %v322, %v480
        %v496 = vadd.f32 %v323, %v484
        %v497 = vadd.f32 %v324, %v486
        %v498 = vadd.f32 %v325, %v488
        %v499 = vadd.f32 %v326, %v490
        %500 = vst [vmem:[#allocation2] sm:$0xff] %v492
        %501 = vst [vmem:[#allocation2 + $0x8] sm:$0xff] %v493
        %502 = vst [vmem:[#allocation2 + $0x10] sm:$0xff] %v494
        %503 = vst [vmem:[#allocation2 + $0x18] sm:$0xff] %v495
        %504 = vst [vmem:[#allocation2 + $0x20] sm:$0xff] %v496
        %505 = vst [vmem:[#allocation2 + $0x28] sm:$0xff] %v497
        %506 = vst [vmem:[#allocation2 + $0x30] sm:$0xff] %v498
        %507 = vst [vmem:[#allocation2 + $0x38] sm:$0xff] %v499
        // Predicated region
        $region49: #{tpu_custom_call.1} parent=31 // pred_check
          %p508 = pneg %p307
        $region50: #{tpu_custom_call.1} parent=31 // pred_check_branch
          %510 = sbr.rel (%p508) target = $region52
        $region51: #{tpu_custom_call.1} parent=31 // pred_region
          %v511 = vld [vmem:[#allocation2] sm:$0xff]
          %v512 = vld [vmem:[#allocation2 + $0x8] sm:$0xff]
          %v513 = vld [vmem:[#allocation2 + $0x10] sm:$0xff]
          %v514 = vld [vmem:[#allocation2 + $0x18] sm:$0xff]
          %v515 = vld [vmem:[#allocation2 + $0x20] sm:$0xff]
          %v516 = vld [vmem:[#allocation2 + $0x28] sm:$0xff]
          %v517 = vld [vmem:[#allocation2 + $0x30] sm:$0xff]
          %v518 = vld [vmem:[#allocation2 + $0x38] sm:$0xff]
          %v519 = vmul.f32 %v511, 0.5
          %v520 = vmul.f32 %v512, 0.5
          %v521 = vtanh.pop %v519
          %v522 = vtanh.pop %v520
          %v523 = vadd.f32 %v521, 1.0
          %v524 = vadd.f32 %v522, 1.0
          %v525 = vmul.f32 %v523, 0.5
          %v526 = vmul.f32 %v524, 0.5
          %v527 = vmul.f32 %v513, 0.5
          %v528 = vmul.f32 %v514, 0.5
          %v529 = vtanh.pop %v527
          %v530 = vtanh.pop %v528
          %v531 = vadd.f32 %v529, 1.0
          %v532 = vadd.f32 %v530, 1.0
          %v533 = vmul.f32 %v531, 0.5
          %v534 = vmul.f32 %v532, 0.5
          %v535 = vtanh.pop %v515
          %v536 = vtanh.pop %v516
          %v537 = vmul.f32 %v517, 0.5
          %v538 = vmul.f32 %v518, 0.5
          %v539 = vtanh.pop %v537
          %v540 = vtanh.pop %v538
          %v541 = vadd.f32 %v539, 1.0
          %v542 = vadd.f32 %v540, 1.0
          %v543 = vmul.f32 %v541, 0.5
          %v544 = vmul.f32 %v542, 0.5
          %v545 = vld [vmem:[%s266] sm:$0xff]
          %v546 = vld [vmem:[%s266 + $0x8] sm:$0xff]
          %v547 = vmul.f32 %v535, %v525
          %v548 = vmul.f32 %v536, %v526
          %v549 = vmul.f32 %v545, %v533
          %v550 = vmul.f32 %v546, %v534
          %v551 = vadd.f32 %v547, %v549
          %v552 = vadd.f32 %v548, %v550
          %v553 = vtanh.pop %v551
          %v554 = vtanh.pop %v552
          %v555 = vmul.f32 %v543, %v553
          %v556 = vmul.f32 %v544, %v554
          %557 = vst [vmem:[%s300] sm:$0xff] %v551
          %558 = vst [vmem:[%s300 + $0x8] sm:$0xff] %v552
          %559 = vst [vmem:[%s293] sm:$0xff] %v555
          %560 = vst [vmem:[%s293 + $0x8] sm:$0xff] %v556
        $region52: #{tpu_custom_call.1} parent=31 // pred_fallthru
          _
        %s561 = sand.u32 %s126, 1
        %s562 = scalar_lea.sflag [#allocation5], %s561
        %s563 = sand.u32 %s126, 1
        %s564 = smul.addr %s563, 16
        %s565 = scalar_lea.vmem [#allocation9], %s564
        %s566 = sand.u32 %s152, 1
        %s567 = scalar_lea.sflag [#allocation11], %s566
        %s568 = sand.u32 %s152, 1
        %s569 = smul.addr %s568, 16
        %s570 = scalar_lea.vmem [#allocation10], %s569
        // Predicated region
        $region53: #{tpu_custom_call.1} parent=31 // pred_check
          %p571 = pneg %p136
        $region54: #{tpu_custom_call.1} parent=31 // pred_check_branch
          %573 = sbr.rel (%p571) target = $region56
        $region55: #{tpu_custom_call.1} parent=31 // pred_region
          %s574 = smul.u32 2, %s30
          %s576 = ssub.s32 256, 256
          %577 = vsyncadd %s562, %s576
          %s578 = smul.addr %s574, 128
          %s579 = scalar_lea.hbm %s3, %s578
          %s581 = sshll.u32 %s565, 4
          %s582 = int_to_ptr.vmem [resolvable:$true] %s581
          %584 = dma.vmem_to_hbm [thread:$0]  %s582, 256, %s579, %s562
        $region56: #{tpu_custom_call.1} parent=31 // pred_fallthru
          _
        // Predicated region
        $region57: #{tpu_custom_call.1} parent=31 // pred_check
          %p585 = pneg %p162
        $region58: #{tpu_custom_call.1} parent=31 // pred_check_branch
          %587 = sbr.rel (%p585) target = $region60
        $region59: #{tpu_custom_call.1} parent=31 // pred_region
          %s588 = smul.u32 2, %s30
          %s590 = ssub.s32 256, 256
          %591 = vsyncadd %s567, %s590
          %s592 = smul.addr %s588, 128
          %s593 = scalar_lea.hbm %s4, %s592
          %s595 = sshll.u32 %s570, 4
          %s596 = int_to_ptr.vmem [resolvable:$true] %s595
          %598 = dma.vmem_to_hbm [thread:$0]  %s596, 256, %s593, %s567
        $region60: #{tpu_custom_call.1} parent=31 // pred_fallthru
          _
      $region32: #{tpu_custom_call.1} parent=5 // pred_fallthru
        _
      %p599 = scmp.le.s32.totalorder 2, %s21
      // Predicated region
      $region61: #{tpu_custom_call.1} parent=5 // pred_check
        %p600 = pneg %p599
      $region62: #{tpu_custom_call.1} parent=5 // pred_check_branch
        %602 = sbr.rel (%p600) target = $region64
      $region63: #{tpu_custom_call.1} parent=5 // pred_region
        %s603 = ssub.s32 %s21, 2
        // Predicated region
        $region65: #{tpu_custom_call.1} parent=63 // pred_check
          %p604 = pneg %p142
        $region66: #{tpu_custom_call.1} parent=63 // pred_check_branch
          %606 = sbr.rel (%p604) target = $region68
        $region67: #{tpu_custom_call.1} parent=63 // pred_region
          %s607 = sand.u32 %s127, 1
          %s608 = scalar_lea.sflag [#allocation5], %s607
          %s609 = sand.u32 %s127, 1
          %s610 = smul.addr %s609, 16
          %s611 = scalar_lea.vmem [#allocation9], %s610
          %612 = dma.done %s608, 256
        $region68: #{tpu_custom_call.1} parent=63 // pred_fallthru
          _
        // Predicated region
        $region69: #{tpu_custom_call.1} parent=63 // pred_check
          %p613 = pneg %p168
        $region70: #{tpu_custom_call.1} parent=63 // pred_check_branch
          %615 = sbr.rel (%p613) target = $region72
        $region71: #{tpu_custom_call.1} parent=63 // pred_region
          %s616 = sand.u32 %s153, 1
          %s617 = scalar_lea.sflag [#allocation11], %s616
          %s618 = sand.u32 %s153, 1
          %s619 = smul.addr %s618, 16
          %s620 = scalar_lea.vmem [#allocation10], %s619
          %621 = dma.done %s617, 256
        $region72: #{tpu_custom_call.1} parent=63 // pred_fallthru
          _
      $region64: #{tpu_custom_call.1} parent=5 // pred_fallthru
        _
    $region6: #{tpu_custom_call.1} parent=1 // loop_footer
      %s25 = sadd.s32 1, %s21
    $region7: #{tpu_custom_call.1} parent=1 // loop_footer_branch
      %20 = sbr.rel target = $region3
    $region8: #{tpu_custom_call.1} parent=1 // loop_exit
      _
    %622 = vsyncpa [#allocation4], 1
    %s623 = scalar_lea.sflag [#allocation4], 1
    %624 = vsyncpa %s623, 1
    %625 = vsyncpa [#allocation7], 1
    %s626 = scalar_lea.sflag [#allocation7], 1
    %627 = vsyncpa %s626, 1
    %628 = vsyncpa [#allocation5], 1
    %s629 = scalar_lea.sflag [#allocation5], 1
    %630 = vsyncpa %s629, 1
    %631 = vsyncpa [#allocation11], 1
    %s632 = scalar_lea.sflag [#allocation11], 1
    %633 = vsyncpa %s632, 1

</llo_original>
